<compile_context>
chip_gen: v6e
topology: v6e:2x2x1
jax: 0.10.0
libtpu: 0.0.40
codegen_flags: <defaults>
</compile_context>

<pallas_src>
import functools

import jax
import jax.numpy as jnp
from jax import lax
from jax.experimental import pallas as pl
from jax.experimental.pallas import tpu as pltpu

EPS = 1e-8
_LANE = 128
_MAX_LANE_CHUNKS = 128          # cap on unrolled 128-lane chunks per block


def _round_up(x, m):
    return -(-x // m) * m


def _cdiv(a, b):
    return -(-a // b)


def _finalize(o_ref, parts, n_feat):
    """Cross-lane reduce the per-lane moment partials and emit 1 - pcc."""
    px, py, pxx, pyy, pxy = parts
    sx = jnp.sum(px, axis=1, keepdims=True)
    sy = jnp.sum(py, axis=1, keepdims=True)
    sxx = jnp.sum(pxx, axis=1, keepdims=True)
    syy = jnp.sum(pyy, axis=1, keepdims=True)
    sxy = jnp.sum(pxy, axis=1, keepdims=True)
    inv_n = jnp.float32(1.0 / n_feat)
    cov = sxy - sx * sy * inv_n
    varx = sxx - sx * sx * inv_n
    vary = syy - sy * sy * inv_n
    # nn.CosineSimilarity: pcc = cov / max(||xc||*||yc||, eps)
    #                          == cov * rsqrt(max(varx*vary, eps^2))
    denom_sq = jnp.maximum(varx * vary, jnp.float32(EPS * EPS))
    pcc = cov * lax.rsqrt(denom_sq)
    o_ref[...] = 1.0 - pcc


def _pearson_kernel(x_ref, y_ref, o_ref, *acc_refs, n_feat, block_d, needs_mask):
    # x_ref, y_ref: (tb, block_d) VMEM tiles.  o_ref: (tb, 1) f32.
    # acc_refs: either () (D fits one block) or 5 x (tb, 128) f32 per-lane
    # accumulators for Sx, Sy, Sxx, Syy, Sxy carried across the D grid axis.
    k = pl.program_id(1)
    nchunks = block_d // _LANE

    if needs_mask:
        lane_ids = lax.broadcasted_iota(jnp.int32, (1, _LANE), 1)
        base = k * block_d

    # Per-lane partial moments for this block: pure VPU work, no XLU.
    px = py = pxx = pyy = pxy = None
    for j in range(nchunks):
        xs = x_ref[:, j * _LANE:(j + 1) * _LANE].astype(jnp.float32)
        ys = y_ref[:, j * _LANE:(j + 1) * _LANE].astype(jnp.float32)
        if needs_mask:
            # Zero lanes past the true feature dim (only bites on the last
            # D block; earlier blocks have limit >= 128 so the mask is all-true).
            valid = lane_ids < (n_feat - j * _LANE - base)
            xs = jnp.where(valid, xs, 0.0)
            ys = jnp.where(valid, ys, 0.0)
        if j == 0:
            px, py = xs, ys
            pxx, pyy, pxy = xs * xs, ys * ys, xs * ys
        else:
            px = px + xs
            py = py + ys
            pxx = pxx + xs * xs
            pyy = pyy + ys * ys
            pxy = pxy + xs * ys
    parts = (px, py, pxx, pyy, pxy)

    if acc_refs:
        # D is split across grid axis 1 (nk >= 2): carry per-lane partial sums
        # in VMEM scratch, reduce across lanes only at the last D block.
        nk = pl.num_programs(1)

        @pl.when(k == 0)
        def _first():
            for r, p in zip(acc_refs, parts):
                r[...] = p

        @pl.when(jnp.logical_and(k > 0, k < nk - 1))
        def _middle():
            for r, p in zip(acc_refs, parts):
                r[...] += p

        @pl.when(k == nk - 1)
        def _last():
            totals = tuple(r[...] + p for r, p in zip(acc_refs, parts))
            _finalize(o_ref, totals, n_feat)
    else:
        _finalize(o_ref, parts, n_feat)


def pearson_cc_loss(inputs, targets, *, tb=None, td=None,
                    block_bytes=4 * 1024 * 1024):
    """1 - Pearson correlation per row, computed in a Pallas TPU kernel.

    inputs, targets: (B, D). Returns (B,) float32. Arbitrary B and D are
    handled without padding copies; tb/td may be overridden for tuning/tests.
    """
    B, D = inputs.shape
    assert targets.shape == (B, D), (inputs.shape, targets.shape)

    itemsize = jnp.dtype(inputs.dtype).itemsize
    sub = {4: 8, 2: 16, 1: 32}.get(itemsize, 8)   # min sublane multiple

    # ---- tile selection: memory-bound, aim for multi-MiB input blocks -------
    b_pad = _round_up(B, sub)
    if tb is None:
        tb_cap = max(sub, (block_bytes // (_LANE * itemsize)) // sub * sub)
        tb = min(b_pad, tb_cap, 2048)
        # Prefer >= 2 batch blocks so v7x megacore can split the "parallel"
        # axis; the block budget is re-spent on a wider D tile instead.
        if B > sub and _cdiv(B, tb) < 2:
            tb = _round_up(_cdiv(B, 2), sub)
    else:
        tb = min(_round_up(tb, sub), b_pad)
    if td is None:
        td = max(_LANE, (block_bytes // (tb * itemsize)) // _LANE * _LANE)
    else:
        td = _round_up(td, _LANE)
    td = min(td, _round_up(D, _LANE), _MAX_LANE_CHUNKS * _LANE)

    nb = _cdiv(B, tb)
    nk = _cdiv(D, td)
    needs_mask = (D % td) != 0
    single_k = nk == 1

    scratch = () if single_k else tuple(
        pltpu.VMEM((tb, _LANE), jnp.float32) for _ in range(5))

    # VMEM budget: 2 inputs x 2 pipeline buffers + output (lane padded) dbuf
    # + per-lane accumulators; generous headroom, capped below v7x's 64 MiB.
    vmem_need = (4 * tb * td * itemsize
                 + 2 * tb * _LANE * 4
                 + (0 if single_k else 5 * tb * _LANE * 4))
    vmem_limit = int(min(64 * 2**20, max(24 * 2**20, int(vmem_need * 1.5))))

    kernel = functools.partial(_pearson_kernel, n_feat=D, block_d=td,
                               needs_mask=needs_mask)

    out = pl.pallas_call(
        kernel,
        out_shape=jax.ShapeDtypeStruct((B, 1), jnp.float32),
        grid_spec=pltpu.PrefetchScalarGridSpec(
            num_scalar_prefetch=0,
            grid=(nb, nk),
            in_specs=[
                pl.BlockSpec((tb, td), lambda i, k: (i, k)),
                pl.BlockSpec((tb, td), lambda i, k: (i, k)),
            ],
            out_specs=pl.BlockSpec((tb, 1), lambda i, k: (i, 0)),
            scratch_shapes=scratch,
        ),
        compiler_params=pltpu.CompilerParams(
            dimension_semantics=("parallel", "arbitrary"),
            vmem_limit_bytes=vmem_limit,
        ),
        cost_estimate=pl.CostEstimate(
            flops=10 * B * D,
            transcendentals=B,
            bytes_accessed=2 * B * D * itemsize + B * 4,
        ),
    )(inputs, targets)
    return out[:, 0]


def _reference(inputs, targets):
    x = inputs.astype(jnp.float32)
    y = targets.astype(jnp.float32)
    xc = x - jnp.mean(x, axis=1, keepdims=True)
    yc = y - jnp.mean(y, axis=1, keepdims=True)
    dot = jnp.sum(xc * yc, axis=1)
    nx2 = jnp.sum(xc * xc, axis=1)
    ny2 = jnp.sum(yc * yc, axis=1)
    pcc = dot / jnp.sqrt(jnp.maximum(nx2 * ny2, EPS * EPS))
    return 1.0 - pcc


if __name__ == "__main__":
    key = jax.random.PRNGKey(0)
    k1, k2, k3, k4, k5, k6, k7, k8 = jax.random.split(key, 8)

    # Case 1: small aligned shapes, single D block, no masking.
    B, D = 8, 128
    x1 = jax.random.normal(k1, (B, D), dtype=jnp.float32)
    y1 = jax.random.normal(k2, (B, D), dtype=jnp.float32)
    out1 = jax.block_until_ready(pearson_cc_loss(x1, y1))
    ref1 = _reference(x1, y1)
    assert out1.shape == (B,)
    assert jnp.allclose(out1, ref1, atol=1e-5, rtol=1e-5), (out1, ref1)

    # Case 2: unaligned B and D with mean offsets; small forced td exercises
    # the multi-block D reduction (first/middle/last), lane masking, batch
    # overhang, and the 2-way batch split.
    B2, D2 = 10, 300
    x2 = jax.random.normal(k3, (B2, D2), dtype=jnp.float32) * 3.0 + 1.5
    y2 = jax.random.normal(k4, (B2, D2), dtype=jnp.float32) - 0.7
    out2 = jax.block_until_ready(pearson_cc_loss(x2, y2, td=128))
    ref2 = _reference(x2, y2)
    assert out2.shape == (B2,)
    assert jnp.allclose(out2, ref2, atol=1e-4, rtol=1e-4), (out2, ref2)

    # Case 3: bfloat16 inputs, batch smaller than the sublane tile.
    B3, D3 = 6, 256
    x3 = jax.random.normal(k5, (B3, D3), dtype=jnp.bfloat16)
    y3 = jax.random.normal(k6, (B3, D3), dtype=jnp.bfloat16)
    out3 = jax.block_until_ready(pearson_cc_loss(x3, y3))
    ref3 = _reference(x3, y3)
    assert out3.shape == (B3,)
    assert jnp.allclose(out3, ref3, atol=1e-4, rtol=1e-4), (out3, ref3)

    # Case 4: default tile-selection path with a small block budget so the
    # two-block D reduction (first + last, no middle) and masking are hit.
    B4, D4 = 24, 2000
    x4 = jax.random.normal(k7, (B4, D4), dtype=jnp.float32) * 0.5 + 2.0
    y4 = jax.random.normal(k8, (B4, D4), dtype=jnp.float32) * 2.0 - 1.0
    out4 = jax.block_until_ready(pearson_cc_loss(x4, y4, block_bytes=64 * 1024))
    ref4 = _reference(x4, y4)
    assert out4.shape == (B4,)
    assert jnp.allclose(out4, ref4, atol=1e-4, rtol=1e-4), (out4, ref4)

    print("KERNEL_OK")
</pallas_src>

<mosaic_0001>
module attributes {stable_mosaic.version = 11 : i64} {
  func.func @_pearson_kernel(%arg0: i32, %arg1: i32, %arg2: memref<8x128xf32, #tpu.memory_space<vmem>>, %arg3: memref<8x128xf32, #tpu.memory_space<vmem>>, %arg4: memref<8x1xf32, #tpu.memory_space<vmem>>) attributes {dimension_semantics = [#tpu.dimension_semantics<parallel>, #tpu.dimension_semantics<arbitrary>], iteration_bounds = array<i64: 1, 1>, scalar_prefetch = 0 : i64, scratch_operands = 0 : i64, tpu.core_type = #tpu.core_type<tc>, window_params = [{transform_indices = @transform_0, window_bounds = array<i64: 8, 128>}, {transform_indices = @transform_1, window_bounds = array<i64: 8, 128>}, {transform_indices = @transform_2, window_bounds = array<i64: 8, 1>}]} {
    %c0 = arith.constant 0 : index
    %c0_0 = arith.constant 0 : index
    %0 = vector.load %arg2[%c0, %c0_0] : memref<8x128xf32, #tpu.memory_space<vmem>>, vector<8x128xf32>
    %c0_1 = arith.constant 0 : index
    %c0_2 = arith.constant 0 : index
    %1 = vector.load %arg3[%c0_1, %c0_2] : memref<8x128xf32, #tpu.memory_space<vmem>>, vector<8x128xf32>
    %2 = arith.mulf %0, %0 : vector<8x128xf32>
    %3 = arith.mulf %1, %1 : vector<8x128xf32>
    %4 = arith.mulf %0, %1 : vector<8x128xf32>
    %cst = arith.constant dense<0.000000e+00> : vector<8xf32>
    %5 = vector.multi_reduction <add>, %0, %cst [1] : vector<8x128xf32> to vector<8xf32>
    %6 = vector.shape_cast %5 : vector<8xf32> to vector<8x1xf32>
    %cst_3 = arith.constant dense<0.000000e+00> : vector<8xf32>
    %7 = vector.multi_reduction <add>, %1, %cst_3 [1] : vector<8x128xf32> to vector<8xf32>
    %8 = vector.shape_cast %7 : vector<8xf32> to vector<8x1xf32>
    %cst_4 = arith.constant dense<0.000000e+00> : vector<8xf32>
    %9 = vector.multi_reduction <add>, %2, %cst_4 [1] : vector<8x128xf32> to vector<8xf32>
    %10 = vector.shape_cast %9 : vector<8xf32> to vector<8x1xf32>
    %cst_5 = arith.constant dense<0.000000e+00> : vector<8xf32>
    %11 = vector.multi_reduction <add>, %3, %cst_5 [1] : vector<8x128xf32> to vector<8xf32>
    %12 = vector.shape_cast %11 : vector<8xf32> to vector<8x1xf32>
    %cst_6 = arith.constant dense<0.000000e+00> : vector<8xf32>
    %13 = vector.multi_reduction <add>, %4, %cst_6 [1] : vector<8x128xf32> to vector<8xf32>
    %14 = vector.shape_cast %13 : vector<8xf32> to vector<8x1xf32>
    %15 = arith.mulf %6, %8 : vector<8x1xf32>
    %cst_7 = arith.constant 7.812500e-03 : f32
    %16 = vector.broadcast %cst_7 : f32 to vector<8x1xf32>
    %17 = arith.mulf %15, %16 : vector<8x1xf32>
    %18 = arith.subf %14, %17 : vector<8x1xf32>
    %19 = arith.mulf %6, %6 : vector<8x1xf32>
    %cst_8 = arith.constant 7.812500e-03 : f32
    %20 = vector.broadcast %cst_8 : f32 to vector<8x1xf32>
    %21 = arith.mulf %19, %20 : vector<8x1xf32>
    %22 = arith.subf %10, %21 : vector<8x1xf32>
    %23 = arith.mulf %8, %8 : vector<8x1xf32>
    %cst_9 = arith.constant 7.812500e-03 : f32
    %24 = vector.broadcast %cst_9 : f32 to vector<8x1xf32>
    %25 = arith.mulf %23, %24 : vector<8x1xf32>
    %26 = arith.subf %12, %25 : vector<8x1xf32>
    %27 = arith.mulf %22, %26 : vector<8x1xf32>
    %cst_10 = arith.constant 1.000000e-16 : f32
    %28 = vector.broadcast %cst_10 : f32 to vector<8x1xf32>
    %29 = arith.maximumf %27, %28 : vector<8x1xf32>
    %30 = math.rsqrt %29 : vector<8x1xf32>
    %31 = arith.mulf %18, %30 : vector<8x1xf32>
    %cst_11 = arith.constant 1.000000e+00 : f32
    %32 = vector.broadcast %cst_11 : f32 to vector<8x1xf32>
    %33 = arith.subf %32, %31 : vector<8x1xf32>
    %c0_12 = arith.constant 0 : index
    %c0_13 = arith.constant 0 : index
    %34 = vector.load %arg4[%c0_12, %c0_13] : memref<8x1xf32, #tpu.memory_space<vmem>>, vector<8x1xf32>
    tpu.vector_store %arg4[%c0_12, %c0_13], %33 {strides = array<i32>} : memref<8x1xf32, #tpu.memory_space<vmem>>, vector<8x1xf32>,
    return
  }
  func.func @transform_0(%arg0: i32, %arg1: i32) -> (i32, i32) {
    %c0_i32 = arith.constant 0 : i32
    return %arg0, %arg1 : i32, i32
  }
  func.func @transform_1(%arg0: i32, %arg1: i32) -> (i32, i32) {
    %c0_i32 = arith.constant 0 : i32
    return %arg0, %arg1 : i32, i32
  }
  func.func @transform_2(%arg0: i32, %arg1: i32) -> (i32, i32) {
    %c0_i32 = arith.constant 0 : i32
    %c0_i32_0 = arith.constant 0 : i32
    return %arg0, %c0_i32 : i32, i32
  }
}

</mosaic_0001>

<llo_original>
// kernel: tpu_custom_call.1
$region0: #{tpu_custom_call.1}
  #allocation0 [shape = 'u32[]', space=smem, size = 0x4, offset = 0x4, fixed_abs, tag = 'smem constant byte address 0x4 - core index']
  #allocation1 [shape = 'u32[144,128]{1,0:T(1,128)}', space=vmem, size = 0x12000, scoped, tag = 'internal scratch']
  %s0 = inlined_call_operand.hbm [shape: f32[8,128], index: 0, kind: input, shape index: {}]
  %s1 = inlined_call_operand.hbm [shape: f32[8,128], index: 1, kind: input, shape index: {}]
  %s2 = inlined_call_operand.vmem [shape: f32[8,1], index: 2, kind: output, shape index: {}]
  %s3 = sld [smem:[#allocation0]]
  $region26: #{tpu_custom_call.1} parent=0
    _
  %s5 = ssub.s32 1, %s3
  %s6 = scalar_select 0, %s5, %s3
  $region1: #{tpu_custom_call.1} parent=0
    #allocation2 [shape = 'u8[4096]{0}', space=vmem, size = 0x1000, scoped, tag = 'input window, operand 0, single buffered']
    #allocation3 [shape = 's32[1]{0}', space=sflag, size = 0x4, scoped, tag = 'scoped memory for tpu_custom_call.1']
    #allocation4 [shape = 'u8[4096]{0}', space=vmem, size = 0x1000, scoped, tag = 'input window, operand 1, single buffered']
    #allocation5 [shape = 's32[1]{0}', space=sflag, size = 0x4, scoped, tag = 'scoped memory for tpu_custom_call.1']
    %7 = vsyncpa [#allocation3], 0
    %8 = vsyncpa [#allocation5], 0
    // Predicated region
    $region2: #{tpu_custom_call.1} parent=1 // pred_check
      _
    $region3: #{tpu_custom_call.1} parent=1 // pred_check_branch
      %10 = sbr.rel (0) target = $region5
    $region4: #{tpu_custom_call.1} parent=1 // pred_region
      %s12 = ssub.s32 128, 128
      %13 = vsyncadd [#allocation3], %s12
      %s15 = sshll.u32 [#allocation2], 4
      %s16 = int_to_ptr.vmem [resolvable:$true] %s15
      %18 = dma.hbm_to_vmem [thread:$0]  %s0, 128, %s16, [#allocation3]
    $region5: #{tpu_custom_call.1} parent=1 // pred_fallthru
      _
    // Predicated region
    $region6: #{tpu_custom_call.1} parent=1 // pred_check
      _
    $region7: #{tpu_custom_call.1} parent=1 // pred_check_branch
      %20 = sbr.rel (0) target = $region9
    $region8: #{tpu_custom_call.1} parent=1 // pred_region
      %s22 = ssub.s32 128, 128
      %23 = vsyncadd [#allocation5], %s22
      %s25 = sshll.u32 [#allocation4], 4
      %s26 = int_to_ptr.vmem [resolvable:$true] %s25
      %28 = dma.hbm_to_vmem [thread:$0]  %s1, 128, %s26, [#allocation5]
    $region9: #{tpu_custom_call.1} parent=1 // pred_fallthru
      _
    // Predicated region
    $region10: #{tpu_custom_call.1} parent=1 // pred_check
      _
    $region11: #{tpu_custom_call.1} parent=1 // pred_check_branch
      %30 = sbr.rel (0) target = $region13
    $region12: #{tpu_custom_call.1} parent=1 // pred_region
      %31 = dma.done [#allocation3], 128
    $region13: #{tpu_custom_call.1} parent=1 // pred_fallthru
      _
    // Predicated region
    $region14: #{tpu_custom_call.1} parent=1 // pred_check
      _
    $region15: #{tpu_custom_call.1} parent=1 // pred_check_branch
      %33 = sbr.rel (0) target = $region17
    $region16: #{tpu_custom_call.1} parent=1 // pred_region
      %34 = dma.done [#allocation5], 128
    $region17: #{tpu_custom_call.1} parent=1 // pred_fallthru
      _
    %v35 = vld [vmem:[#allocation2] sm:$0xff]
    %v36 = vld [vmem:[#allocation4] sm:$0xff]
    %v37 = vmul.f32 %v35, %v35
    %v38 = vmul.f32 %v36, %v36
    %v39 = vmul.f32 %v35, %v36
    %40 = vadd.xlane.f32.xlu0 %v35
    %v41 = vpop.xlane.xlu0 %40
    %42 = vadd.xlane.f32.xlu0 %v36
    %v43 = vpop.xlane.xlu0 %42
    %44 = vadd.xlane.f32.xlu0 %v37
    %v45 = vpop.xlane.xlu0 %44
    %46 = vadd.xlane.f32.xlu0 %v38
    %v47 = vpop.xlane.xlu0 %46
    %48 = vadd.xlane.f32.xlu0 %v39
    %v49 = vpop.xlane.xlu0 %48
    %v50 = vmul.f32 %v41, %v43
    %v51 = vmul.f32 %v50, 0.0078125
    %v52 = vsub.f32 %v49, %v51
    %v53 = vmul.f32 %v41, %v41
    %v54 = vmul.f32 %v53, 0.0078125
    %v55 = vsub.f32 %v45, %v54
    %v56 = vmul.f32 %v43, %v43
    %v57 = vmul.f32 %v56, 0.0078125
    %v58 = vsub.f32 %v47, %v57
    %v59 = vmul.f32 %v55, %v58
    %v60 = vmax.f32 %v59, 1e-16
    %v61 = vrsqrt.pop %v60
    %v62 = vmul.f32 %v52, %v61
    %v63 = vsub.f32 1.0, %v62
    %vm64 = vcmask 7168
    %65 = vst.msk [vmem:[%s2] sm:$0xff] %vm64, %v63
    // Predicated region
    $region18: #{tpu_custom_call.1} parent=1 // pred_check
      _
    $region19: #{tpu_custom_call.1} parent=1 // pred_check_branch
      %67 = sbr.rel (0) target = $region21
    $region20: #{tpu_custom_call.1} parent=1 // pred_region
      _
    $region21: #{tpu_custom_call.1} parent=1 // pred_fallthru
      _
    // Predicated region
    $region22: #{tpu_custom_call.1} parent=1 // pred_check
      _
    $region23: #{tpu_custom_call.1} parent=1 // pred_check_branch
      %69 = sbr.rel (0) target = $region25
    $region24: #{tpu_custom_call.1} parent=1 // pred_region
      _
    $region25: #{tpu_custom_call.1} parent=1 // pred_fallthru
      _
    %70 = vsyncpa [#allocation3], 1
    %71 = vsyncpa [#allocation5], 1

</llo_original>
